<compile_context>
chip_gen: v7x
topology: tpu7x:2x2x1
jax: 0.10.0
libtpu: 0.0.40
codegen_flags: <defaults>
</compile_context>

<pallas_src>
import jax
import jax.numpy as jnp
from jax import lax
from jax.experimental import pallas as pl
from jax.experimental.pallas import tpu as pltpu


def _gradient_bandit_kernel(xt_ref, w_ref, consts_ref, gaugr_ref, out_ref):
    # Per grid step (T = batch tile, on the lane axis):
    #   xt_ref     : (C, T)     tile of contexts, transposed (batch on lanes)
    #   w_ref      : (A, C)     classifier weight / hyperplanes (bias=False)
    #   consts_ref : (A, 2)     col 0 = agent_rewards, col 1 = ||w_a||^2
    #   gaugr_ref  : (A+2, A)   [ W W^T ; ||w||^2 row ; agent_rewards row ]
    #   out_ref    : (A, T)     sigmoid(classifier(x'))  (lane-dense output)
    xt = xt_ref[...]
    w = w_ref[...]
    consts = consts_ref[...]
    gaugr = gaugr_ref[...]

    C, T = xt.shape
    A = w.shape[0]
    eps = 1e-12  # F.normalize default eps

    ar_col = consts[:, 0:1]     # (A, 1) agent_rewards
    diag_col = consts[:, 1:2]   # (A, 1) ||w_a||^2

    # scores[a, i] = w_a . x_i   (MXU): (A,C) x (C,T) -> (A,T)
    scores = jnp.dot(w, xt, preferred_element_type=jnp.float32)

    iota_a = lax.broadcasted_iota(jnp.int32, (A, T), 0)

    def col_argmax(v):
        """First-occurrence argmax over arms (axis 0).
        Returns (one-hot (A,T) f32, per-column max (1,T))."""
        m = jnp.max(v, axis=0, keepdims=True)
        idx = jnp.min(jnp.where(v >= m, iota_a, A), axis=0, keepdims=True)
        return (iota_a == idx).astype(jnp.float32), m

    # y_hat = argmax_a scores
    oh_y, _ = col_argmax(scores)                                          # (A, T)

    # One MXU op selects gram[y_i,:], ||w_{y_i}||^2 and agent_rewards[y_i].
    sel_y = jnp.dot(gaugr, oh_y, preferred_element_type=jnp.float32)      # (A+2, T)
    g_y = sel_y[:A, :]              # gram[y_i, :]       (A, T)
    diag_y = sel_y[A:A + 1, :]      # ||w_{y_i}||^2      (1, T)
    r_y = sel_y[A + 1:A + 2, :]     # agent_rewards[y_i] (1, T)

    score_y = jnp.sum(oh_y * scores, axis=0, keepdims=True)               # (1, T)
    rewards = ar_col - r_y                                                # (A, T)

    # betas = normalize(W - W[y]); distances = x . betas   (Gram identity norms)
    norm2 = jnp.maximum(diag_col + diag_y - 2.0 * g_y, 0.0)               # (A, T)
    denom = jnp.maximum(jnp.sqrt(norm2), eps)                             # (A, T)
    distances = (scores - score_y) / denom                                # (A, T)
    benefits = rewards - jnp.abs(distances)                               # (A, T)

    # zero_y = argmax_a(-0.0001 * scores), first occurrence (matches reference)
    oh_zero, _ = col_argmax(-0.0001 * scores)
    r_zero = jnp.sum(oh_zero * ar_col, axis=0, keepdims=True)             # (1, T)
    zero_dist = jnp.sqrt(jnp.sum(xt * xt, axis=0, keepdims=True))         # (1, T)
    zero_benefit = r_zero - r_y - zero_dist                               # (1, T)

    # best = argmax(benefits); x_cand = x + betas[best] * distances[best] * 1.0001
    oh_best, max_benefit = col_argmax(benefits)
    dist_best = jnp.sum(oh_best * distances, axis=0, keepdims=True)       # (1, T)
    den_best = jnp.sum(oh_best * denom, axis=0, keepdims=True)            # (1, T)
    scale_best = dist_best / den_best                                     # single per-row divide
    # TODO(synk): pl.reciprocal(den_best, approx=True) would move this to the
    # EUP for free but perturbs exact fp32 parity with PyTorch; gated off.

    # fused (W[best] - W[y]) projection: one (C,A)x(A,T) MXU op -> (C, T)
    beta_num = lax.dot_general(w, oh_best - oh_y, (((0,), (0,)), ((), ())),
                               preferred_element_type=jnp.float32)        # (C, T)

    x_cand = xt + beta_num * (scale_best * 1.0001)                        # (C, T)
    x_prime = jnp.where(zero_benefit > max_benefit, -0.0001 * xt, x_cand) # (C, T)

    # y_hat = sigmoid(classifier(x_prime)), bias=False: (A,C)x(C,T) -> (A,T)
    logits = jnp.dot(w, x_prime, preferred_element_type=jnp.float32)
    out_ref[...] = jax.nn.sigmoid(logits)                                 # lane-dense store


def _choose_tile(n, tile_n):
    """Lane-aligned (multiple-of-128) batch tile of ~tile_n rows, keeping the
    grid at >= 2 steps (v7x megacore) without padding x in HBM."""
    if n <= 128:
        return n                                   # single full-extent block
    steps = max(2, 2 * (-(-n // (2 * tile_n))))    # even number of grid steps
    tile = -(-n // steps)
    tile = ((tile + 127) // 128) * 128             # lane-aligned
    return min(tile, ((n + 127) // 128) * 128)


def gradient_bandit_forward(x, agent_rewards, weight, *, tile_n=2048):
    """x: (n, context_size) f32; agent_rewards: (n_arms,) f32;
    weight: (n_arms, context_size) f32. Returns y_hat: (n, n_arms) f32."""
    n, c = x.shape
    a = weight.shape[0]

    x = x.astype(jnp.float32)
    w = weight.astype(jnp.float32)
    ar = agent_rewards.astype(jnp.float32)

    # ---- hoisted weight-only work (computed once, not per grid step) ----
    gram = jnp.dot(w, w.T)                                     # (A, A)
    diag = jnp.sum(w * w, axis=-1)                             # (A,) = diag(gram)
    gaugr = jnp.concatenate(
        [gram, diag.reshape(1, a), ar.reshape(1, a)], axis=0)  # (A+2, A)
    consts = jnp.stack([ar, diag], axis=1)                     # (A, 2)

    # ---- batch on the 128-lane axis: feed x as (C, N), emit (A, N) ----
    xt = x.T                                                   # one tiny transpose

    tile = _choose_tile(n, tile_n)
    grid = (pl.cdiv(n, tile),)

    out_t = pl.pallas_call(
        _gradient_bandit_kernel,
        out_shape=jax.ShapeDtypeStruct((a, n), jnp.float32),
        grid=grid,
        in_specs=[
            pl.BlockSpec((c, tile), lambda i: (0, i)),       # x^T: batch-tiled on lanes
            pl.BlockSpec((a, c), lambda i: (0, 0)),          # weight: resident
            pl.BlockSpec((a, 2), lambda i: (0, 0)),          # [agent_rewards | ||w||^2]
            pl.BlockSpec((a + 2, a), lambda i: (0, 0)),      # augmented gram rows
        ],
        out_specs=pl.BlockSpec((a, tile), lambda i: (0, i)), # lane-dense output slab
        compiler_params=pltpu.CompilerParams(
            dimension_semantics=("parallel",)),              # shard tiles across TCs
    )(xt, w, consts, gaugr)
    return out_t.T                                           # (n, n_arms)


if __name__ == "__main__":
    # Module config (forward requires bias=False because slow_argmax asserts it).
    n_arms = 8
    context_size = 16
    n = 512  # -> 2 lane-aligned tiles of 256: exercises the pipelined parallel grid

    key = jax.random.PRNGKey(0)
    kx, kr, kw = jax.random.split(key, 3)

    # nn.Linear(context_size, n_arms, bias=False)-style init:
    # weight ~ U(-1/sqrt(context_size), 1/sqrt(context_size))
    bound = 1.0 / (context_size ** 0.5)
    weight = jax.random.uniform(kw, (n_arms, context_size),
                                minval=-bound, maxval=bound, dtype=jnp.float32)
    x = jax.random.normal(kx, (n, context_size), dtype=jnp.float32)
    agent_rewards = jax.random.normal(kr, (n_arms,), dtype=jnp.float32)

    y_hat = gradient_bandit_forward(x, agent_rewards, weight)
    jax.block_until_ready(y_hat)
    assert y_hat.shape == (n, n_arms)
    assert bool(jnp.all(jnp.isfinite(y_hat)))
    # TODO(synk): the optional MSE-loss branch (y is not None) and the
    # `variances` noise path are plain-JAX/NumPy glue and are not in the kernel.
    print("KERNEL_OK")
</pallas_src>

<mosaic_0001>
module attributes {stable_mosaic.version = 11 : i64} {
  func.func @_gradient_bandit_kernel(%arg0: i32, %arg1: memref<16x256xf32, #tpu.memory_space<vmem>>, %arg2: memref<8x16xf32, #tpu.memory_space<vmem>>, %arg3: memref<8x2xf32, #tpu.memory_space<vmem>>, %arg4: memref<10x8xf32, #tpu.memory_space<vmem>>, %arg5: memref<8x256xf32, #tpu.memory_space<vmem>>) attributes {dimension_semantics = [#tpu.dimension_semantics<parallel>], iteration_bounds = array<i64: 2>, scalar_prefetch = 0 : i64, scratch_operands = 0 : i64, tpu.core_type = #tpu.core_type<tc>, window_params = [{transform_indices = @transform_0, window_bounds = array<i64: 16, 256>}, {pipeline_mode = #tpu.pipeline_mode<synchronous>, transform_indices = @transform_1, window_bounds = array<i64: 8, 16>}, {pipeline_mode = #tpu.pipeline_mode<synchronous>, transform_indices = @transform_2, window_bounds = array<i64: 8, 2>}, {pipeline_mode = #tpu.pipeline_mode<synchronous>, transform_indices = @transform_3, window_bounds = array<i64: 10, 8>}, {transform_indices = @transform_4, window_bounds = array<i64: 8, 256>}]} {
    %c0 = arith.constant 0 : index
    %c0_0 = arith.constant 0 : index
    %0 = vector.load %arg1[%c0, %c0_0] : memref<16x256xf32, #tpu.memory_space<vmem>>, vector<16x256xf32>
    %c0_1 = arith.constant 0 : index
    %c0_2 = arith.constant 0 : index
    %1 = vector.load %arg2[%c0_1, %c0_2] : memref<8x16xf32, #tpu.memory_space<vmem>>, vector<8x16xf32>
    %c0_3 = arith.constant 0 : index
    %c0_4 = arith.constant 0 : index
    %2 = vector.load %arg3[%c0_3, %c0_4] : memref<8x2xf32, #tpu.memory_space<vmem>>, vector<8x2xf32>
    %c0_5 = arith.constant 0 : index
    %c0_6 = arith.constant 0 : index
    %3 = vector.load %arg4[%c0_5, %c0_6] : memref<10x8xf32, #tpu.memory_space<vmem>>, vector<10x8xf32>
    %4 = vector.extract_strided_slice %2 {offsets = [0, 0], sizes = [8, 1], strides = [1, 1]} : vector<8x2xf32> to vector<8x1xf32>
    %5 = vector.extract_strided_slice %2 {offsets = [0, 1], sizes = [8, 1], strides = [1, 1]} : vector<8x2xf32> to vector<8x1xf32>
    %cst = arith.constant dense<0.000000e+00> : vector<8x256xf32>
    %6 = tpu.matmul %1, %0, %cst {dimension_numbers = #tpu.dot_dimension_numbers<[1], [0], [0], [1], [0, 0, 1, 1], [], []>} : vector<8x16xf32>, vector<16x256xf32>, vector<8x256xf32> -> vector<8x256xf32>
    %7 = tpu.iota {dimensions = array<i32: 0>} : vector<8x256xi32>
    %cst_7 = arith.constant dense<0xFF800000> : vector<256xf32>
    %8 = vector.multi_reduction <maximumf>, %6, %cst_7 [0] : vector<8x256xf32> to vector<256xf32>
    %9 = vector.shape_cast %8 : vector<256xf32> to vector<1x256xf32>
    %10 = vector.broadcast %9 : vector<1x256xf32> to vector<8x256xf32>
    %11 = arith.cmpf oge, %6, %10 : vector<8x256xf32>
    %c8_i32 = arith.constant 8 : i32
    %12 = vector.broadcast %c8_i32 : i32 to vector<8x256xi32>
    %13 = arith.select %11, %7, %12 : vector<8x256xi1>, vector<8x256xi32>
    %cst_8 = arith.constant dense<2147483647> : vector<256xi32>
    %14 = vector.multi_reduction <minsi>, %13, %cst_8 [0] : vector<8x256xi32> to vector<256xi32>
    %15 = vector.shape_cast %14 : vector<256xi32> to vector<1x256xi32>
    %16 = vector.broadcast %15 : vector<1x256xi32> to vector<8x256xi32>
    %17 = arith.cmpi eq, %7, %16 : vector<8x256xi32>
    %18 = arith.extui %17 : vector<8x256xi1> to vector<8x256xi32>
    %19 = arith.sitofp %18 : vector<8x256xi32> to vector<8x256xf32>
    %cst_9 = arith.constant dense<0.000000e+00> : vector<10x256xf32>
    %20 = tpu.matmul %3, %19, %cst_9 {dimension_numbers = #tpu.dot_dimension_numbers<[1], [0], [0], [1], [0, 0, 1, 1], [], []>} : vector<10x8xf32>, vector<8x256xf32>, vector<10x256xf32> -> vector<10x256xf32>
    %21 = vector.extract_strided_slice %20 {offsets = [0, 0], sizes = [8, 256], strides = [1, 1]} : vector<10x256xf32> to vector<8x256xf32>
    %22 = vector.extract_strided_slice %20 {offsets = [8, 0], sizes = [1, 256], strides = [1, 1]} : vector<10x256xf32> to vector<1x256xf32>
    %23 = vector.extract_strided_slice %20 {offsets = [9, 0], sizes = [1, 256], strides = [1, 1]} : vector<10x256xf32> to vector<1x256xf32>
    %24 = arith.mulf %19, %6 : vector<8x256xf32>
    %cst_10 = arith.constant dense<0.000000e+00> : vector<256xf32>
    %25 = vector.multi_reduction <add>, %24, %cst_10 [0] : vector<8x256xf32> to vector<256xf32>
    %26 = vector.shape_cast %25 : vector<256xf32> to vector<1x256xf32>
    %27 = vector.broadcast %4 : vector<8x1xf32> to vector<8x256xf32>
    %28 = vector.broadcast %23 : vector<1x256xf32> to vector<8x256xf32>
    %29 = arith.subf %27, %28 : vector<8x256xf32>
    %30 = vector.broadcast %5 : vector<8x1xf32> to vector<8x256xf32>
    %31 = vector.broadcast %22 : vector<1x256xf32> to vector<8x256xf32>
    %32 = arith.addf %30, %31 : vector<8x256xf32>
    %cst_11 = arith.constant 2.000000e+00 : f32
    %33 = vector.broadcast %cst_11 : f32 to vector<8x256xf32>
    %34 = arith.mulf %33, %21 : vector<8x256xf32>
    %35 = arith.subf %32, %34 : vector<8x256xf32>
    %cst_12 = arith.constant 0.000000e+00 : f32
    %36 = vector.broadcast %cst_12 : f32 to vector<8x256xf32>
    %37 = arith.maximumf %35, %36 : vector<8x256xf32>
    %38 = math.sqrt %37 : vector<8x256xf32>
    %cst_13 = arith.constant 9.99999996E-13 : f32
    %39 = vector.broadcast %cst_13 : f32 to vector<8x256xf32>
    %40 = arith.maximumf %38, %39 : vector<8x256xf32>
    %41 = vector.broadcast %26 : vector<1x256xf32> to vector<8x256xf32>
    %42 = arith.subf %6, %41 : vector<8x256xf32>
    %43 = arith.divf %42, %40 : vector<8x256xf32>
    %44 = math.absf %43 : vector<8x256xf32>
    %45 = arith.subf %29, %44 : vector<8x256xf32>
    %cst_14 = arith.constant -9.99999974E-5 : f32
    %46 = vector.broadcast %cst_14 : f32 to vector<8x256xf32>
    %47 = arith.mulf %46, %6 : vector<8x256xf32>
    %cst_15 = arith.constant dense<0xFF800000> : vector<256xf32>
    %48 = vector.multi_reduction <maximumf>, %47, %cst_15 [0] : vector<8x256xf32> to vector<256xf32>
    %49 = vector.shape_cast %48 : vector<256xf32> to vector<1x256xf32>
    %50 = vector.broadcast %49 : vector<1x256xf32> to vector<8x256xf32>
    %51 = arith.cmpf oge, %47, %50 : vector<8x256xf32>
    %c8_i32_16 = arith.constant 8 : i32
    %52 = vector.broadcast %c8_i32_16 : i32 to vector<8x256xi32>
    %53 = arith.select %51, %7, %52 : vector<8x256xi1>, vector<8x256xi32>
    %cst_17 = arith.constant dense<2147483647> : vector<256xi32>
    %54 = vector.multi_reduction <minsi>, %53, %cst_17 [0] : vector<8x256xi32> to vector<256xi32>
    %55 = vector.shape_cast %54 : vector<256xi32> to vector<1x256xi32>
    %56 = vector.broadcast %55 : vector<1x256xi32> to vector<8x256xi32>
    %57 = arith.cmpi eq, %7, %56 : vector<8x256xi32>
    %58 = arith.extui %57 : vector<8x256xi1> to vector<8x256xi32>
    %59 = arith.sitofp %58 : vector<8x256xi32> to vector<8x256xf32>
    %60 = vector.broadcast %4 : vector<8x1xf32> to vector<8x256xf32>
    %61 = arith.mulf %59, %60 : vector<8x256xf32>
    %cst_18 = arith.constant dense<0.000000e+00> : vector<256xf32>
    %62 = vector.multi_reduction <add>, %61, %cst_18 [0] : vector<8x256xf32> to vector<256xf32>
    %63 = vector.shape_cast %62 : vector<256xf32> to vector<1x256xf32>
    %64 = arith.mulf %0, %0 : vector<16x256xf32>
    %cst_19 = arith.constant dense<0.000000e+00> : vector<256xf32>
    %65 = vector.multi_reduction <add>, %64, %cst_19 [0] : vector<16x256xf32> to vector<256xf32>
    %66 = vector.shape_cast %65 : vector<256xf32> to vector<1x256xf32>
    %67 = math.sqrt %66 : vector<1x256xf32>
    %68 = arith.subf %63, %23 : vector<1x256xf32>
    %69 = arith.subf %68, %67 : vector<1x256xf32>
    %cst_20 = arith.constant dense<0xFF800000> : vector<256xf32>
    %70 = vector.multi_reduction <maximumf>, %45, %cst_20 [0] : vector<8x256xf32> to vector<256xf32>
    %71 = vector.shape_cast %70 : vector<256xf32> to vector<1x256xf32>
    %72 = vector.broadcast %71 : vector<1x256xf32> to vector<8x256xf32>
    %73 = arith.cmpf oge, %45, %72 : vector<8x256xf32>
    %c8_i32_21 = arith.constant 8 : i32
    %74 = vector.broadcast %c8_i32_21 : i32 to vector<8x256xi32>
    %75 = arith.select %73, %7, %74 : vector<8x256xi1>, vector<8x256xi32>
    %cst_22 = arith.constant dense<2147483647> : vector<256xi32>
    %76 = vector.multi_reduction <minsi>, %75, %cst_22 [0] : vector<8x256xi32> to vector<256xi32>
    %77 = vector.shape_cast %76 : vector<256xi32> to vector<1x256xi32>
    %78 = vector.broadcast %77 : vector<1x256xi32> to vector<8x256xi32>
    %79 = arith.cmpi eq, %7, %78 : vector<8x256xi32>
    %80 = arith.extui %79 : vector<8x256xi1> to vector<8x256xi32>
    %81 = arith.sitofp %80 : vector<8x256xi32> to vector<8x256xf32>
    %82 = arith.mulf %81, %43 : vector<8x256xf32>
    %cst_23 = arith.constant dense<0.000000e+00> : vector<256xf32>
    %83 = vector.multi_reduction <add>, %82, %cst_23 [0] : vector<8x256xf32> to vector<256xf32>
    %84 = vector.shape_cast %83 : vector<256xf32> to vector<1x256xf32>
    %85 = arith.mulf %81, %40 : vector<8x256xf32>
    %cst_24 = arith.constant dense<0.000000e+00> : vector<256xf32>
    %86 = vector.multi_reduction <add>, %85, %cst_24 [0] : vector<8x256xf32> to vector<256xf32>
    %87 = vector.shape_cast %86 : vector<256xf32> to vector<1x256xf32>
    %88 = arith.divf %84, %87 : vector<1x256xf32>
    %89 = arith.subf %81, %19 : vector<8x256xf32>
    %cst_25 = arith.constant dense<0.000000e+00> : vector<16x256xf32>
    %90 = tpu.matmul %1, %89, %cst_25 {dimension_numbers = #tpu.dot_dimension_numbers<[0], [0], [1], [1], [0, 1, 1, 1], [], []>} : vector<8x16xf32>, vector<8x256xf32>, vector<16x256xf32> -> vector<16x256xf32>
    %cst_26 = arith.constant 1.000100e+00 : f32
    %91 = vector.broadcast %cst_26 : f32 to vector<1x256xf32>
    %92 = arith.mulf %88, %91 : vector<1x256xf32>
    %93 = vector.broadcast %92 : vector<1x256xf32> to vector<16x256xf32>
    %94 = arith.mulf %90, %93 : vector<16x256xf32>
    %95 = arith.addf %0, %94 : vector<16x256xf32>
    %96 = arith.cmpf ogt, %69, %71 : vector<1x256xf32>
    %cst_27 = arith.constant -9.99999974E-5 : f32
    %97 = vector.broadcast %cst_27 : f32 to vector<16x256xf32>
    %98 = arith.mulf %97, %0 : vector<16x256xf32>
    %99 = vector.shape_cast %96 : vector<1x256xi1> to vector<1x256xi1>
    %100 = vector.broadcast %99 : vector<1x256xi1> to vector<16x256xi1>
    %101 = arith.select %100, %98, %95 : vector<16x256xi1>, vector<16x256xf32>
    %cst_28 = arith.constant dense<0.000000e+00> : vector<8x256xf32>
    %102 = tpu.matmul %1, %101, %cst_28 {dimension_numbers = #tpu.dot_dimension_numbers<[1], [0], [0], [1], [0, 0, 1, 1], [], []>} : vector<8x16xf32>, vector<16x256xf32>, vector<8x256xf32> -> vector<8x256xf32>
    %103 = arith.negf %102 : vector<8x256xf32>
    %104 = math.exp %103 : vector<8x256xf32>
    %cst_29 = arith.constant 1.000000e+00 : f32
    %105 = vector.broadcast %cst_29 : f32 to vector<8x256xf32>
    %106 = arith.addf %105, %104 : vector<8x256xf32>
    %107 = arith.divf %105, %106 : vector<8x256xf32>
    %c0_30 = arith.constant 0 : index
    %c0_31 = arith.constant 0 : index
    %108 = vector.load %arg5[%c0_30, %c0_31] : memref<8x256xf32, #tpu.memory_space<vmem>>, vector<8x256xf32>
    tpu.vector_store %arg5[%c0_30, %c0_31], %107 {strides = array<i32>} : memref<8x256xf32, #tpu.memory_space<vmem>>, vector<8x256xf32>,
    return
  }
  func.func @transform_0(%arg0: i32) -> (i32, i32) {
    %c0_i32 = arith.constant 0 : i32
    %c0_i32_0 = arith.constant 0 : i32
    return %c0_i32, %arg0 : i32, i32
  }
  func.func @transform_1(%arg0: i32) -> (i32, i32) {
    %c0_i32 = arith.constant 0 : i32
    %c0_i32_0 = arith.constant 0 : i32
    %c0_i32_1 = arith.constant 0 : i32
    return %c0_i32, %c0_i32_0 : i32, i32
  }
  func.func @transform_2(%arg0: i32) -> (i32, i32) {
    %c0_i32 = arith.constant 0 : i32
    %c0_i32_0 = arith.constant 0 : i32
    %c0_i32_1 = arith.constant 0 : i32
    return %c0_i32, %c0_i32_0 : i32, i32
  }
  func.func @transform_3(%arg0: i32) -> (i32, i32) {
    %c0_i32 = arith.constant 0 : i32
    %c0_i32_0 = arith.constant 0 : i32
    %c0_i32_1 = arith.constant 0 : i32
    return %c0_i32, %c0_i32_0 : i32, i32
  }
  func.func @transform_4(%arg0: i32) -> (i32, i32) {
    %c0_i32 = arith.constant 0 : i32
    %c0_i32_0 = arith.constant 0 : i32
    return %c0_i32, %arg0 : i32, i32
  }
}

</mosaic_0001>

<llo_original>
// kernel: tpu_custom_call.1
$region0: #{tpu_custom_call.1}
  #allocation0 [shape = 'u32[]', space=smem, size = 0x4, offset = 0x4, fixed_abs, tag = 'smem constant byte address 0x4 - core index']
  #allocation1 [shape = 'u32[144,128]{1,0:T(1,128)}', space=vmem, size = 0x12000, scoped, tag = 'internal scratch']
  %s0 = inlined_call_operand.hbm [shape: f32[16,512], index: 0, kind: input, shape index: {}]
  %s1 = inlined_call_operand.vmem [shape: f32[8,16], index: 1, kind: input, shape index: {}]
  %s2 = inlined_call_operand.vmem [shape: f32[8,2], index: 2, kind: input, shape index: {}]
  %s3 = inlined_call_operand.vmem [shape: f32[10,8], index: 3, kind: input, shape index: {}]
  %s4 = inlined_call_operand.hbm [shape: f32[8,512], index: 4, kind: output, shape index: {}]
  %s5 = sld [smem:[#allocation0]]
  $region53: #{tpu_custom_call.1} parent=0
    _
  %s7 = ssub.s32 1, %s5
  %s8 = scalar_select 0, %s7, %s5
  $region1: #{tpu_custom_call.1} parent=0
    #allocation2 [shape = 'u8[32768]{0}', space=vmem, size = 0x8000, scoped, tag = 'input window, operand 0']
    #allocation3 [shape = 's32[2]{0}', space=sflag, size = 0x8, scoped, tag = 'scoped memory for tpu_custom_call.1']
    #allocation4 [shape = 's32[2]{0}', space=sflag, size = 0x8, scoped, tag = 'scoped memory for tpu_custom_call.1']
    #allocation5 [shape = 'u8[16384]{0}', space=vmem, size = 0x4000, scoped, tag = 'output window, operand 0']
    %9 = vsyncpa [#allocation3], 0
    %s10 = scalar_lea.sflag [#allocation3], 1
    %11 = vsyncpa %s10, 0
    %12 = vsyncpa [#allocation4], 0
    %s13 = scalar_lea.sflag [#allocation4], 1
    %14 = vsyncpa %s13, 0
    loop: start=0, step=1, limit=4
    $region2: #{tpu_custom_call.1} parent=1 // loop_pre_header
      _
    $region3: #{tpu_custom_call.1} parent=1 // loop_header
      %s16 = sphi 0, %s20
      %p17 = scmp.ge.s32.totalorder %s16, 4
      %s26 = sphi 0, %s28
      %s29 = sphi 0, %s26
      %s30 = sphi 0, %s29
      %s46 = sphi 0, %s30
      %s50 = sphi 0, %s50
      %s52 = sphi 0, %s50
      %s53 = sphi 0, %s52
      %s67 = sphi 0, %s53
      %s71 = sphi 0, %s71
      %s73 = sphi 0, %s71
      %s74 = sphi 0, %s73
      %s88 = sphi 0, %s74
      %s92 = sphi 0, %s92
      %s94 = sphi 0, %s92
      %s95 = sphi 0, %s94
      %s109 = sphi 0, %s95
      %s115 = sphi 0, %s117
      %s118 = sphi 0, %s115
      %s119 = sphi 0, %s118
      %s135 = sphi 0, %s119
    $region4: #{tpu_custom_call.1} parent=1 // loop_header_branch
      %19 = sbr.rel (%p17) target = $region8
    $region5: #{tpu_custom_call.1} parent=1 // loop_body
      %s21 = ssub.s32 %s16, 1
      %s22 = ssub.s32 %s16, 2
      %s23 = sadd.s32 %s16, 1
      %s24 = ssub.s32 %s16, %s23
      %p25 = scmp.eq.s32.totalorder %s24, 0
      %s27 = sadd.s32 %s26, 1
      %s28 = scalar_select %p25, %s26, %s27
      %p31 = pneg %p25
      %p32 = scmp.eq.s32.totalorder %s16, 1
      %p33 = por %p31, %p32
      %p34 = scmp.ne.s32.totalorder %s26, %s29
      %p35 = scmp.eq.s32.totalorder %s16, 0
      %p36 = por %p34, %p35
      %p37 = scmp.ne.s32.totalorder %s26, %s29
      %p38 = scmp.eq.s32.totalorder %s21, 1
      %p39 = por %p37, %p38
      %p40 = scmp.ne.s32.totalorder %s29, %s30
      %p41 = scmp.eq.s32.totalorder %s21, 0
      %p42 = por %p40, %p41
      %p43 = scmp.ne.s32.totalorder %s29, %s30
      %p44 = scmp.eq.s32.totalorder %s22, 1
      %p45 = por %p43, %p44
      %p47 = scmp.ne.s32.totalorder %s30, %s46
      %p48 = scmp.eq.s32.totalorder %s22, 0
      %p49 = por %p47, %p48
      %s51 = sadd.s32 %s50, 1
      %p54 = scmp.eq.s32.totalorder %s16, 1
      %p55 = scmp.ne.s32.totalorder %s50, %s52
      %p56 = scmp.eq.s32.totalorder %s16, 0
      %p57 = por %p55, %p56
      %p58 = scmp.ne.s32.totalorder %s50, %s52
      %p59 = scmp.eq.s32.totalorder %s21, 1
      %p60 = por %p58, %p59
      %p61 = scmp.ne.s32.totalorder %s52, %s53
      %p62 = scmp.eq.s32.totalorder %s21, 0
      %p63 = por %p61, %p62
      %p64 = scmp.ne.s32.totalorder %s52, %s53
      %p65 = scmp.eq.s32.totalorder %s22, 1
      %p66 = por %p64, %p65
      %p68 = scmp.ne.s32.totalorder %s53, %s67
      %p69 = scmp.eq.s32.totalorder %s22, 0
      %p70 = por %p68, %p69
      %s72 = sadd.s32 %s71, 1
      %p75 = scmp.eq.s32.totalorder %s16, 1
      %p76 = scmp.ne.s32.totalorder %s71, %s73
      %p77 = scmp.eq.s32.totalorder %s16, 0
      %p78 = por %p76, %p77
      %p79 = scmp.ne.s32.totalorder %s71, %s73
      %p80 = scmp.eq.s32.totalorder %s21, 1
      %p81 = por %p79, %p80
      %p82 = scmp.ne.s32.totalorder %s73, %s74
      %p83 = scmp.eq.s32.totalorder %s21, 0
      %p84 = por %p82, %p83
      %p85 = scmp.ne.s32.totalorder %s73, %s74
      %p86 = scmp.eq.s32.totalorder %s22, 1
      %p87 = por %p85, %p86
      %p89 = scmp.ne.s32.totalorder %s74, %s88
      %p90 = scmp.eq.s32.totalorder %s22, 0
      %p91 = por %p89, %p90
      %s93 = sadd.s32 %s92, 1
      %p96 = scmp.eq.s32.totalorder %s16, 1
      %p97 = scmp.ne.s32.totalorder %s92, %s94
      %p98 = scmp.eq.s32.totalorder %s16, 0
      %p99 = por %p97, %p98
      %p100 = scmp.ne.s32.totalorder %s92, %s94
      %p101 = scmp.eq.s32.totalorder %s21, 1
      %p102 = por %p100, %p101
      %p103 = scmp.ne.s32.totalorder %s94, %s95
      %p104 = scmp.eq.s32.totalorder %s21, 0
      %p105 = por %p103, %p104
      %p106 = scmp.ne.s32.totalorder %s94, %s95
      %p107 = scmp.eq.s32.totalorder %s22, 1
      %p108 = por %p106, %p107
      %p110 = scmp.ne.s32.totalorder %s95, %s109
      %p111 = scmp.eq.s32.totalorder %s22, 0
      %p112 = por %p110, %p111
      %s113 = ssub.s32 %s16, %s23
      %p114 = scmp.eq.s32.totalorder %s113, 0
      %s116 = sadd.s32 %s115, 1
      %s117 = scalar_select %p114, %s115, %s116
      %p120 = pneg %p114
      %p121 = scmp.eq.s32.totalorder %s16, 1
      %p122 = por %p120, %p121
      %p123 = scmp.ne.s32.totalorder %s115, %s118
      %p124 = scmp.eq.s32.totalorder %s16, 0
      %p125 = por %p123, %p124
      %p126 = scmp.ne.s32.totalorder %s115, %s118
      %p127 = scmp.eq.s32.totalorder %s21, 1
      %p128 = por %p126, %p127
      %p129 = scmp.ne.s32.totalorder %s118, %s119
      %p130 = scmp.eq.s32.totalorder %s21, 0
      %p131 = por %p129, %p130
      %p132 = scmp.ne.s32.totalorder %s118, %s119
      %p133 = scmp.eq.s32.totalorder %s22, 1
      %p134 = por %p132, %p133
      %p136 = scmp.ne.s32.totalorder %s119, %s135
      %p137 = scmp.eq.s32.totalorder %s22, 0
      %p138 = por %p136, %p137
      %p139 = scmp.le.s32.totalorder 1, %s16
      %p140 = scmp.lt.s32.totalorder %s16, 3
      %p141 = pnand %p139, %p140
      %p142 = pneg %p141
      // Predicated region
      $region9: #{tpu_custom_call.1} parent=5 // pred_check
        _
      $region10: #{tpu_custom_call.1} parent=5 // pred_check_branch
        %144 = sbr.rel (%p141) target = $region12
      $region11: #{tpu_custom_call.1} parent=5 // pred_region
        %s145 = ssub.s32 %s16, 1
        // Predicated region
        $region13: #{tpu_custom_call.1} parent=11 // pred_check
          %p146 = pneg %p63
        $region14: #{tpu_custom_call.1} parent=11 // pred_check_branch
          %148 = sbr.rel (%p146) target = $region16
        $region15: #{tpu_custom_call.1} parent=11 // pred_region
          _
        $region16: #{tpu_custom_call.1} parent=11 // pred_fallthru
          _
        // Predicated region
        $region17: #{tpu_custom_call.1} parent=11 // pred_check
          %p149 = pneg %p84
        $region18: #{tpu_custom_call.1} parent=11 // pred_check_branch
          %151 = sbr.rel (%p149) target = $region20
        $region19: #{tpu_custom_call.1} parent=11 // pred_region
          _
        $region20: #{tpu_custom_call.1} parent=11 // pred_fallthru
          _
        // Predicated region
        $region21: #{tpu_custom_call.1} parent=11 // pred_check
          %p152 = pneg %p105
        $region22: #{tpu_custom_call.1} parent=11 // pred_check_branch
          %154 = sbr.rel (%p152) target = $region24
        $region23: #{tpu_custom_call.1} parent=11 // pred_region
          _
        $region24: #{tpu_custom_call.1} parent=11 // pred_fallthru
          _
      $region12: #{tpu_custom_call.1} parent=5 // pred_fallthru
        _
      %p155 = scmp.lt.s32.totalorder %s16, 2
      // Predicated region
      $region25: #{tpu_custom_call.1} parent=5 // pred_check
        %p156 = pneg %p155
      $region26: #{tpu_custom_call.1} parent=5 // pred_check_branch
        %158 = sbr.rel (%p156) target = $region28
      $region27: #{tpu_custom_call.1} parent=5 // pred_region
        // Predicated region
        $region29: #{tpu_custom_call.1} parent=27 // pred_check
          %p159 = pneg %p36
        $region30: #{tpu_custom_call.1} parent=27 // pred_check_branch
          %161 = sbr.rel (%p159) target = $region32
        $region31: #{tpu_custom_call.1} parent=27 // pred_region
          %s162 = sand.u32 %s26, 1
          %s163 = scalar_lea.sflag [#allocation3], %s162
          %s164 = sand.u32 %s26, 1
          %s165 = smul.addr %s164, 32
          %s166 = scalar_lea.vmem [#allocation2], %s165
          %s167 = smul.u32 2, %s16
          %s169 = ssub.s32 512, 512
          %170 = vsyncadd %s163, %s169
          %s171 = smul.addr %s167, 128
          %s172 = scalar_lea.hbm %s0, %s171
          %s173 = sshll.u32 %s166, 4
          %s174 = int_to_ptr.vmem [resolvable:$true] %s173
          %179 = dma.hbm_to_vmem [thread:$0]  %s172, 512, %s174, %s163, 512, 256, 16
        $region32: #{tpu_custom_call.1} parent=27 // pred_fallthru
          _
      $region28: #{tpu_custom_call.1} parent=5 // pred_fallthru
        _
      %p180 = scmp.le.s32.totalorder 1, %s16
      %p181 = scmp.lt.s32.totalorder %s16, 3
      %p182 = pnand %p180, %p181
      %p183 = pneg %p182
      // Predicated region
      $region33: #{tpu_custom_call.1} parent=5 // pred_check
        _
      $region34: #{tpu_custom_call.1} parent=5 // pred_check_branch
        %185 = sbr.rel (%p182) target = $region36
      $region35: #{tpu_custom_call.1} parent=5 // pred_region
        %s186 = ssub.s32 %s16, 1
        %s187 = sand.u32 %s29, 1
        %s188 = scalar_lea.sflag [#allocation3], %s187
        %s189 = sand.u32 %s29, 1
        %s190 = smul.addr %s189, 32
        %s191 = scalar_lea.vmem [#allocation2], %s190
        // Predicated region
        $region37: #{tpu_custom_call.1} parent=35 // pred_check
          %p192 = pneg %p42
        $region38: #{tpu_custom_call.1} parent=35 // pred_check_branch
          %194 = sbr.rel (%p192) target = $region40
        $region39: #{tpu_custom_call.1} parent=35 // pred_region
          %195 = dma.done %s188, 512
        $region40: #{tpu_custom_call.1} parent=35 // pred_fallthru
          _
        %s196 = sand.u32 %s29, 1
        %s197 = scalar_lea.sflag [#allocation3], %s196
        %s198 = sand.u32 %s29, 1
        %s199 = smul.addr %s198, 32
        %s200 = scalar_lea.vmem [#allocation2], %s199
        %p201 = pneg %p42
        %p202 = pneg %p39
        %p203 = pneg %p63
        %p204 = pneg %p60
        %p205 = pneg %p84
        %p206 = pneg %p81
        %p207 = pneg %p105
        %p208 = pneg %p102
        %p209 = pneg %p131
        %p210 = pneg %p128
        %s211 = sand.u32 %s118, 1
        %s212 = scalar_lea.sflag [#allocation4], %s211
        %s213 = sand.u32 %s118, 1
        %s214 = smul.addr %s213, 16
        %s215 = scalar_lea.vmem [#allocation5], %s214
        %s216 = smul.u32 2, %s21
        %s217 = smul.u32 2, %s21
        %v218 = vld [vmem:[%s191] sm:$0xff]
        %v219 = vld [vmem:[%s191 + $0x8] sm:$0xff]
        %v220 = vld [vmem:[%s191 + $0x10] sm:$0xff]
        %v221 = vld [vmem:[%s191 + $0x18] sm:$0xff]
        %v222 = vld [vmem:[%s1] sm:$0xff]
        %v223 = vld [vmem:[%s2] sm:$0xff]
        %v224 = vld [vmem:[%s3] sm:$0xff]
        %v225 = vld [vmem:[%s3 + $0x8] sm:$0x3]
        %vm226 = vcmask 130048
        %v228 = vsel %vm226, %v222, 0
        %230 = vmatprep.subr.mxu0 %v219
        %231 = vmatpush1.msra.mxu0 %v218
        %232 = vmatprep.subr.mxu0 %v221
        %233 = vmatpush1.msra.mxu0 %v220
        %234 = vmatprep.subr.mxu0 0.0
        %235 = vmatpush1.msra.mxu0 0.0
        %236 = vmatprep.subr.mxu0 0.0
        %237 = vmatpush1.msra.mxu0 0.0
        %238 = vmatprep.subr.mxu0 0.0
        %239 = vmatpush1.msra.mxu0 0.0
        %240 = vmatprep.subr.mxu0 0.0
        %241 = vmatpush1.msra.mxu0 0.0
        %242 = vmatprep.subr.mxu0 0.0
        %243 = vmatpush1.msra.mxu0 0.0
        %244 = vmatprep.subr.mxu0 0.0
        %245 = vmatpush1.msra.mxu0 0.0
        %246 = vmatprep.subr.mxu0 0.0
        %247 = vmatpush1.msra.mxu0 0.0
        %248 = vmatprep.subr.mxu0 0.0
        %249 = vmatpush1.msra.mxu0 0.0
        %250 = vmatprep.subr.mxu0 0.0
        %251 = vmatpush1.msra.mxu0 0.0
        %252 = vmatprep.subr.mxu0 0.0
        %253 = vmatpush1.msra.mxu0 0.0
        %254 = vmatprep.subr.mxu0 0.0
        %255 = vmatpush1.msra.mxu0 0.0
        %256 = vmatprep.subr.mxu0 0.0
        %257 = vmatpush1.msra.mxu0 0.0
        %258 = vmatprep.subr.mxu0 0.0
        %259 = vmatpush1.msra.mxu0 0.0
        %260 = vmatprep.subr.mxu0 0.0
        %261 = vmatpush1.msra.mxu0 0.0
        %262 = vmatprep.subr.mxu0 0.0
        %263 = vmatpush1.msra.mxu0 0.0
        %264 = vmatprep.subr.mxu0 0.0
        %265 = vmatpush1.msra.mxu0 0.0
        %266 = vmatprep.subr.mxu0 0.0
        %267 = vmatpush1.msra.mxu0 0.0
        %268 = vmatprep.subr.mxu0 0.0
        %269 = vmatpush1.msra.mxu0 0.0
        %270 = vmatprep.subr.mxu0 0.0
        %271 = vmatpush1.msra.mxu0 0.0
        %272 = vmatprep.subr.mxu0 0.0
        %273 = vmatpush1.msra.mxu0 0.0
        %274 = vmatprep.subr.mxu0 0.0
        %275 = vmatpush1.msra.mxu0 0.0
        %276 = vmatprep.subr.mxu0 0.0
        %277 = vmatpush1.msra.mxu0 0.0
        %278 = vmatprep.subr.mxu0 0.0
        %279 = vmatpush1.msra.mxu0 0.0
        %280 = vmatprep.subr.mxu0 0.0
        %281 = vmatpush1.msra.mxu0 0.0
        %282 = vmatprep.subr.mxu0 0.0
        %283 = vmatpush1.msra.mxu0 0.0
        %284 = vmatprep.subr.mxu0 0.0
        %285 = vmatpush1.msra.mxu0 0.0
        %286 = vmatprep.subr.mxu0 0.0
        %287 = vmatpush1.msra.mxu0 0.0
        %288 = vmatprep.subr.mxu0 0.0
        %289 = vmatpush1.msra.mxu0 0.0
        %290 = vmatprep.subr.mxu0 0.0
        %291 = vmatpush1.msra.mxu0 0.0
        %292 = vmatprep.subr.mxu0 0.0
        %293 = vmatpush1.msra.mxu0 0.0
        %294 = vmatprep.mubr.f32.mxu0 0.0
        %295 = vmatmul.mubr.f32.gmra.mrb[0].mxu0 %v228
        %v296 = vpop.f32.mrb[0].mxu0
        %v297 = vadd.f32 0.0, %v296
        %v298 = vpop.f32.mrb[0].mxu0
        %v299 = vadd.f32 0.0, %v298
        %300 = vdwg.mxu0
        %v301 = vlaneseq
        %v302 = vshrl.u32 %v301, 7
        %v303 = vrot.slane %v297, 4
        %v304 = vmax.f32 %v297, %v303
        %v305 = vrot.slane %v304, 2
        %v306 = vmax.f32 %v304, %v305
        %v307 = vrot.slane %v306, 1
        %v308 = vmax.f32 %v306, %v307
        %v309 = vrot.slane %v299, 4
        %v310 = vmax.f32 %v299, %v309
        %v311 = vrot.slane %v310, 2
        %v312 = vmax.f32 %v310, %v311
        %v313 = vrot.slane %v312, 1
        %v314 = vmax.f32 %v312, %v313
        %vm315 = vcmp.ge.f32.partialorder %v297, %v308
        %vm316 = vcmp.ge.f32.partialorder %v299, %v314
        %v317 = vsel %vm315, %v302, 8
        %v318 = vsel %vm316, %v302, 8
        %v319 = vrot.slane %v317, 4
        %vm320 = vcmp.lt.s32.totalorder %v317, %v319
        %v321 = vsel %vm320, %v317, %v319
        %v322 = vrot.slane %v321, 2
        %vm323 = vcmp.lt.s32.totalorder %v321, %v322
        %v324 = vsel %vm323, %v321, %v322
        %v325 = vrot.slane %v324, 1
        %vm326 = vcmp.lt.s32.totalorder %v324, %v325
        %v327 = vsel %vm326, %v324, %v325
        %v328 = vrot.slane %v318, 4
        %vm329 = vcmp.lt.s32.totalorder %v318, %v328
        %v330 = vsel %vm329, %v318, %v328
        %v331 = vrot.slane %v330, 2
        %vm332 = vcmp.lt.s32.totalorder %v330, %v331
        %v333 = vsel %vm332, %v330, %v331
        %v334 = vrot.slane %v333, 1
        %vm335 = vcmp.lt.s32.totalorder %v333, %v334
        %v336 = vsel %vm335, %v333, %v334
        %vm337 = vcmp.eq.s32.totalorder %v302, %v327
        %vm338 = vcmp.eq.s32.totalorder %v302, %v336
        %v339 = vsel %vm337, 1, 0
        %v340 = vsel %vm338, 1, 0
        %v341 = vcvt.s32.f32 %v339
        %v342 = vcvt.s32.f32 %v340
        %vm343 = vcmask 64512
        %v345 = vsel %vm343, %v224, 0
        %v348 = vsel %vm343, %v225, 0
        %350 = vmatprep.subr.mxu0 %v342
        %351 = vmatpush1.msra.mxu0 %v341
        %352 = vmatprep.subr.mxu0 0.0
        %353 = vmatpush1.msra.mxu0 0.0
        %354 = vmatprep.subr.mxu0 0.0
        %355 = vmatpush1.msra.mxu0 0.0
        %356 = vmatprep.subr.mxu0 0.0
        %357 = vmatpush1.msra.mxu0 0.0
        %358 = vmatprep.subr.mxu0 0.0
        %359 = vmatpush1.msra.mxu0 0.0
        %360 = vmatprep.subr.mxu0 0.0
        %361 = vmatpush1.msra.mxu0 0.0
        %362 = vmatprep.subr.mxu0 0.0
        %363 = vmatpush1.msra.mxu0 0.0
        %364 = vmatprep.subr.mxu0 0.0
        %365 = vmatpush1.msra.mxu0 0.0
        %366 = vmatprep.subr.mxu0 0.0
        %367 = vmatpush1.msra.mxu0 0.0
        %368 = vmatprep.subr.mxu0 0.0
        %369 = vmatpush1.msra.mxu0 0.0
        %370 = vmatprep.subr.mxu0 0.0
        %371 = vmatpush1.msra.mxu0 0.0
        %372 = vmatprep.subr.mxu0 0.0
        %373 = vmatpush1.msra.mxu0 0.0
        %374 = vmatprep.subr.mxu0 0.0
        %375 = vmatpush1.msra.mxu0 0.0
        %376 = vmatprep.subr.mxu0 0.0
        %377 = vmatpush1.msra.mxu0 0.0
        %378 = vmatprep.subr.mxu0 0.0
        %379 = vmatpush1.msra.mxu0 0.0
        %380 = vmatprep.subr.mxu0 0.0
        %381 = vmatpush1.msra.mxu0 0.0
        %382 = vmatprep.subr.mxu0 0.0
        %383 = vmatpush1.msra.mxu0 0.0
        %384 = vmatprep.subr.mxu0 0.0
        %385 = vmatpush1.msra.mxu0 0.0
        %386 = vmatprep.subr.mxu0 0.0
        %387 = vmatpush1.msra.mxu0 0.0
        %388 = vmatprep.subr.mxu0 0.0
        %389 = vmatpush1.msra.mxu0 0.0
        %390 = vmatprep.subr.mxu0 0.0
        %391 = vmatpush1.msra.mxu0 0.0
        %392 = vmatprep.subr.mxu0 0.0
        %393 = vmatpush1.msra.mxu0 0.0
        %394 = vmatprep.subr.mxu0 0.0
        %395 = vmatpush1.msra.mxu0 0.0
        %396 = vmatprep.subr.mxu0 0.0
        %397 = vmatpush1.msra.mxu0 0.0
        %398 = vmatprep.subr.mxu0 0.0
        %399 = vmatpush1.msra.mxu0 0.0
        %400 = vmatprep.subr.mxu0 0.0
        %401 = vmatpush1.msra.mxu0 0.0
        %402 = vmatprep.subr.mxu0 0.0
        %403 = vmatpush1.msra.mxu0 0.0
        %404 = vmatprep.subr.mxu0 0.0
        %405 = vmatpush1.msra.mxu0 0.0
        %406 = vmatprep.subr.mxu0 0.0
        %407 = vmatpush1.msra.mxu0 0.0
        %408 = vmatprep.subr.mxu0 0.0
        %409 = vmatpush1.msra.mxu0 0.0
        %410 = vmatprep.subr.mxu0 0.0
        %411 = vmatpush1.msra.mxu0 0.0
        %412 = vmatprep.subr.mxu0 0.0
        %413 = vmatpush1.msra.mxu0 0.0
        %414 = vmatprep.mubr.f32.mxu0 0.0
        %415 = vmatmul.mubr.f32.gmra.mrb[0].mxu0 %v345
        %v416 = vpop.f32.mrb[0].mxu0
        %v417 = vadd.f32 0.0, %v416
        %v418 = vpop.f32.mrb[0].mxu0
        %v419 = vadd.f32 0.0, %v418
        %420 = vmatprep.mubr.f32.mxu0 0.0
        %421 = vmatmul.mubr.f32.gmra.mrb[0].mxu0 %v348
        %v422 = vpop.f32.mrb[0].mxu0
        %v423 = vadd.f32 0.0, %v422
        %v424 = vpop.f32.mrb[0].mxu0
        %v425 = vadd.f32 0.0, %v424
        %426 = vdwg.mxu0
        %v427 = vmul.f32 %v341, %v297
        %v428 = vmul.f32 %v342, %v299
        %v429 = vrot.slane %v427, 4
        %v430 = vadd.f32 %v427, %v429
        %v431 = vrot.slane %v430, 2
        %v432 = vadd.f32 %v430, %v431
        %v433 = vrot.slane %v432, 1
        %v434 = vadd.f32 %v432, %v433
        %v435 = vrot.slane %v428, 4
        %v436 = vadd.f32 %v428, %v435
        %v437 = vrot.slane %v436, 2
        %v438 = vadd.f32 %v436, %v437
        %v439 = vrot.slane %v438, 1
        %v440 = vadd.f32 %v438, %v439
        %442 = vset.pattern.permute.xlu0 0
        %443 = vperm.xlu0 %442, %v223
        %v444 = vpop.permute.xlu0 %443
        %v446 = vlaneseq
        %v447 = vshrl.u32 %v446, 7
        %v448 = vsub.s32 1, %v447
        %v449 = vrot.slane %v423, %v448
        %v450 = vlaneseq
        %v451 = vshrl.u32 %v450, 7
        %v452 = vsub.s32 1, %v451
        %v453 = vrot.slane %v425, %v452
        %v454 = vsub.f32 %v444, %v449
        %v455 = vsub.f32 %v444, %v453
        %456 = vset.pattern.permute.xlu0 1
        %457 = vperm.xlu0 %456, %v223
        %v458 = vpop.permute.xlu0 %457
        %v460 = vlaneseq
        %v461 = vshrl.u32 %v460, 7
        %v462 = vsub.s32 0, %v461
        %v463 = vrot.slane %v423, %v462
        %v464 = vlaneseq
        %v465 = vshrl.u32 %v464, 7
        %v466 = vsub.s32 0, %v465
        %v467 = vrot.slane %v425, %v466
        %v468 = vadd.f32 %v458, %v463
        %v469 = vadd.f32 %v458, %v467
        %v470 = vmul.f32 %v417, 2.0
        %v471 = vmul.f32 %v419, 2.0
        %v472 = vsub.f32 %v468, %v470
        %v473 = vsub.f32 %v469, %v471
        %v474 = vmax.f32 %v472, 0.0
        %v475 = vmax.f32 %v473, 0.0
        %v476 = vrsqrt.pop %v474
        %v477 = vmul.f32 %v474, %v476
        %vm478 = vcmp.eq.f32.partialorder %v474, inf
        %v479 = vsel %vm478, %v474, %v477
        %vm480 = vcmp.eq.f32.partialorder %v474, 0.0
        %v481 = vand.u32 %v474, 2147483648
        %v482 = vsel %vm480, %v481, %v479
        %v483 = vrsqrt.pop %v475
        %v484 = vmul.f32 %v475, %v483
        %vm485 = vcmp.eq.f32.partialorder %v475, inf
        %v486 = vsel %vm485, %v475, %v484
        %vm487 = vcmp.eq.f32.partialorder %v475, 0.0
        %v488 = vand.u32 %v475, 2147483648
        %v489 = vsel %vm487, %v488, %v486
        %v490 = vmax.f32 %v482, 1e-12
        %v491 = vmax.f32 %v489, 1e-12
        %v492 = vsub.f32 %v297, %v434
        %v493 = vsub.f32 %v299, %v440
        %v494 = vrcp.pop %v490
        %v495 = vmul.f32 %v492, %v494
        %v496 = vrcp.pop %v491
        %v497 = vmul.f32 %v493, %v496
        %v498 = vand.u32 2147483647, %v495
        %v499 = vand.u32 2147483647, %v497
        %v500 = vsub.f32 %v454, %v498
        %v501 = vsub.f32 %v455, %v499
        %v502 = vmul.f32 %v297, -0.0001
        %v503 = vmul.f32 %v299, -0.0001
        %v504 = vrot.slane %v502, 4
        %v505 = vmax.f32 %v502, %v504
        %v506 = vrot.slane %v505, 2
        %v507 = vmax.f32 %v505, %v506
        %v508 = vrot.slane %v507, 1
        %v509 = vmax.f32 %v507, %v508
        %v510 = vrot.slane %v503, 4
        %v511 = vmax.f32 %v503, %v510
        %v512 = vrot.slane %v511, 2
        %v513 = vmax.f32 %v511, %v512
        %v514 = vrot.slane %v513, 1
        %v515 = vmax.f32 %v513, %v514
        %vm516 = vcmp.ge.f32.partialorder %v502, %v509
        %vm517 = vcmp.ge.f32.partialorder %v503, %v515
        %v518 = vsel %vm516, %v302, 8
        %v519 = vsel %vm517, %v302, 8
        %v520 = vrot.slane %v518, 4
        %vm521 = vcmp.lt.s32.totalorder %v518, %v520
        %v522 = vsel %vm521, %v518, %v520
        %v523 = vrot.slane %v522, 2
        %vm524 = vcmp.lt.s32.totalorder %v522, %v523
        %v525 = vsel %vm524, %v522, %v523
        %v526 = vrot.slane %v525, 1
        %vm527 = vcmp.lt.s32.totalorder %v525, %v526
        %v528 = vsel %vm527, %v525, %v526
        %v529 = vrot.slane %v519, 4
        %vm530 = vcmp.lt.s32.totalorder %v519, %v529
        %v531 = vsel %vm530, %v519, %v529
        %v532 = vrot.slane %v531, 2
        %vm533 = vcmp.lt.s32.totalorder %v531, %v532
        %v534 = vsel %vm533, %v531, %v532
        %v535 = vrot.slane %v534, 1
        %vm536 = vcmp.lt.s32.totalorder %v534, %v535
        %v537 = vsel %vm536, %v534, %v535
        %vm538 = vcmp.eq.s32.totalorder %v302, %v528
        %vm539 = vcmp.eq.s32.totalorder %v302, %v537
        %v540 = vsel %vm538, 1, 0
        %v541 = vsel %vm539, 1, 0
        %v542 = vcvt.s32.f32 %v540
        %v543 = vcvt.s32.f32 %v541
        %v544 = vmul.f32 %v542, %v444
        %v545 = vmul.f32 %v543, %v444
        %v546 = vrot.slane %v544, 4
        %v547 = vadd.f32 %v544, %v546
        %v548 = vrot.slane %v547, 2
        %v549 = vadd.f32 %v547, %v548
        %v550 = vrot.slane %v549, 1
        %v551 = vadd.f32 %v549, %v550
        %v552 = vrot.slane %v545, 4
        %v553 = vadd.f32 %v545, %v552
        %v554 = vrot.slane %v553, 2
        %v555 = vadd.f32 %v553, %v554
        %v556 = vrot.slane %v555, 1
        %v557 = vadd.f32 %v555, %v556
        %v558 = vmul.f32 %v218, %v218
        %v559 = vmul.f32 %v219, %v219
        %v560 = vmul.f32 %v220, %v220
        %v561 = vmul.f32 %v221, %v221
        %v562 = vadd.f32 %v558, %v560
        %v563 = vrot.slane %v562, 4
        %v564 = vadd.f32 %v562, %v563
        %v565 = vrot.slane %v564, 2
        %v566 = vadd.f32 %v564, %v565
        %v567 = vrot.slane %v566, 1
        %v568 = vadd.f32 %v566, %v567
        %v569 = vadd.f32 %v559, %v561
        %v570 = vrot.slane %v569, 4
        %v571 = vadd.f32 %v569, %v570
        %v572 = vrot.slane %v571, 2
        %v573 = vadd.f32 %v571, %v572
        %v574 = vrot.slane %v573, 1
        %v575 = vadd.f32 %v573, %v574
        %v576 = vrsqrt.pop %v568
        %v577 = vmul.f32 %v568, %v576
        %vm578 = vcmp.eq.f32.partialorder %v568, inf
        %v579 = vsel %vm578, %v568, %v577
        %vm580 = vcmp.eq.f32.partialorder %v568, 0.0
        %v581 = vand.u32 %v568, 2147483648
        %v582 = vsel %vm580, %v581, %v579
        %v583 = vrsqrt.pop %v575
        %v584 = vmul.f32 %v575, %v583
        %vm585 = vcmp.eq.f32.partialorder %v575, inf
        %v586 = vsel %vm585, %v575, %v584
        %vm587 = vcmp.eq.f32.partialorder %v575, 0.0
        %v588 = vand.u32 %v575, 2147483648
        %v589 = vsel %vm587, %v588, %v586
        %v590 = vsub.f32 %v551, %v423
        %v591 = vsub.f32 %v557, %v425
        %v592 = vsub.f32 %v590, %v582
        %v593 = vsub.f32 %v591, %v589
        %v594 = vrot.slane %v500, 4
        %v595 = vmax.f32 %v500, %v594
        %v596 = vrot.slane %v595, 2
        %v597 = vmax.f32 %v595, %v596
        %v598 = vrot.slane %v597, 1
        %v599 = vmax.f32 %v597, %v598
        %v600 = vrot.slane %v501, 4
        %v601 = vmax.f32 %v501, %v600
        %v602 = vrot.slane %v601, 2
        %v603 = vmax.f32 %v601, %v602
        %v604 = vrot.slane %v603, 1
        %v605 = vmax.f32 %v603, %v604
        %vm606 = vcmp.ge.f32.partialorder %v500, %v599
        %vm607 = vcmp.ge.f32.partialorder %v501, %v605
        %v608 = vsel %vm606, %v302, 8
        %v609 = vsel %vm607, %v302, 8
        %v610 = vrot.slane %v608, 4
        %vm611 = vcmp.lt.s32.totalorder %v608, %v610
        %v612 = vsel %vm611, %v608, %v610
        %v613 = vrot.slane %v612, 2
        %vm614 = vcmp.lt.s32.totalorder %v612, %v613
        %v615 = vsel %vm614, %v612, %v613
        %v616 = vrot.slane %v615, 1
        %vm617 = vcmp.lt.s32.totalorder %v615, %v616
        %v618 = vsel %vm617, %v615, %v616
        %v619 = vrot.slane %v609, 4
        %vm620 = vcmp.lt.s32.totalorder %v609, %v619
        %v621 = vsel %vm620, %v609, %v619
        %v622 = vrot.slane %v621, 2
        %vm623 = vcmp.lt.s32.totalorder %v621, %v622
        %v624 = vsel %vm623, %v621, %v622
        %v625 = vrot.slane %v624, 1
        %vm626 = vcmp.lt.s32.totalorder %v624, %v625
        %v627 = vsel %vm626, %v624, %v625
        %vm628 = vcmp.eq.s32.totalorder %v302, %v618
        %vm629 = vcmp.eq.s32.totalorder %v302, %v627
        %v630 = vsel %vm628, 1, 0
        %v631 = vsel %vm629, 1, 0
        %v632 = vcvt.s32.f32 %v630
        %v633 = vcvt.s32.f32 %v631
        %v634 = vmul.f32 %v632, %v495
        %v635 = vmul.f32 %v633, %v497
        %v636 = vrot.slane %v634, 4
        %v637 = vadd.f32 %v634, %v636
        %v638 = vrot.slane %v637, 2
        %v639 = vadd.f32 %v637, %v638
        %v640 = vrot.slane %v639, 1
        %v641 = vadd.f32 %v639, %v640
        %v642 = vrot.slane %v635, 4
        %v643 = vadd.f32 %v635, %v642
        %v644 = vrot.slane %v643, 2
        %v645 = vadd.f32 %v643, %v644
        %v646 = vrot.slane %v645, 1
        %v647 = vadd.f32 %v645, %v646
        %v648 = vmul.f32 %v632, %v490
        %v649 = vmul.f32 %v633, %v491
        %v650 = vrot.slane %v648, 4
        %v651 = vadd.f32 %v648, %v650
        %v652 = vrot.slane %v651, 2
        %v653 = vadd.f32 %v651, %v652
        %v654 = vrot.slane %v653, 1
        %v655 = vadd.f32 %v653, %v654
        %v656 = vrot.slane %v649, 4
        %v657 = vadd.f32 %v649, %v656
        %v658 = vrot.slane %v657, 2
        %v659 = vadd.f32 %v657, %v658
        %v660 = vrot.slane %v659, 1
        %v661 = vadd.f32 %v659, %v660
        %v662 = vrcp.pop %v655
        %v663 = vmul.f32 %v641, %v662
        %v664 = vrcp.pop %v661
        %v665 = vmul.f32 %v647, %v664
        %v666 = vsub.f32 %v632, %v341
        %v667 = vsub.f32 %v633, %v342
        %668 = vxpose.xlu0.b32.start [1/16] %v222, 128
        %669 = vxpose.xlu0.b32.cont [2/16] 0.0, 128
        %670 = vxpose.xlu0.b32.cont [3/16] 0.0, 128
        %671 = vxpose.xlu0.b32.cont [4/16] 0.0, 128
        %672 = vxpose.xlu0.b32.cont [5/16] 0.0, 128
        %673 = vxpose.xlu0.b32.cont [6/16] 0.0, 128
        %674 = vxpose.xlu0.b32.cont [7/16] 0.0, 128
        %675 = vxpose.xlu0.b32.cont [8/16] 0.0, 128
        %676 = vxpose.xlu0.b32.cont [9/16] 0.0, 128
        %677 = vxpose.xlu0.b32.cont [10/16] 0.0, 128
        %678 = vxpose.xlu0.b32.cont [11/16] 0.0, 128
        %679 = vxpose.xlu0.b32.cont [12/16] 0.0, 128
        %680 = vxpose.xlu0.b32.cont [13/16] 0.0, 128
        %681 = vxpose.xlu0.b32.cont [14/16] 0.0, 128
        %682 = vxpose.xlu0.b32.cont [15/16] 0.0, 128
        %683 = vxpose.xlu0.b32.end [16/16] 0.0, 128
        %v684 = vpop.trf.xlu0
        %v685 = vpop.trf.xlu0
        %v686 = vpop.trf.xlu0
        %v687 = vpop.trf.xlu0
        %v688 = vpop.trf.xlu0
        %v689 = vpop.trf.xlu0
        %v690 = vpop.trf.xlu0
        %v691 = vpop.trf.xlu0
        %v692 = vpop.trf.xlu0
        %v693 = vpop.trf.xlu0
        %v694 = vpop.trf.xlu0
        %v695 = vpop.trf.xlu0
        %v696 = vpop.trf.xlu0
        %v697 = vpop.trf.xlu0
        %v698 = vpop.trf.xlu0
        %v699 = vpop.trf.xlu0
        %v701 = vsel %vm343, %v684, 0
        %v704 = vsel %vm343, %v685, 0
        %706 = vmatprep.subr.mxu0 %v667
        %707 = vmatpush1.msra.mxu0 %v666
        %708 = vmatprep.subr.mxu0 0.0
        %709 = vmatpush1.msra.mxu0 0.0
        %710 = vmatprep.subr.mxu0 0.0
        %711 = vmatpush1.msra.mxu0 0.0
        %712 = vmatprep.subr.mxu0 0.0
        %713 = vmatpush1.msra.mxu0 0.0
        %714 = vmatprep.subr.mxu0 0.0
        %715 = vmatpush1.msra.mxu0 0.0
        %716 = vmatprep.subr.mxu0 0.0
        %717 = vmatpush1.msra.mxu0 0.0
        %718 = vmatprep.subr.mxu0 0.0
        %719 = vmatpush1.msra.mxu0 0.0
        %720 = vmatprep.subr.mxu0 0.0
        %721 = vmatpush1.msra.mxu0 0.0
        %722 = vmatprep.subr.mxu0 0.0
        %723 = vmatpush1.msra.mxu0 0.0
        %724 = vmatprep.subr.mxu0 0.0
        %725 = vmatpush1.msra.mxu0 0.0
        %726 = vmatprep.subr.mxu0 0.0
        %727 = vmatpush1.msra.mxu0 0.0
        %728 = vmatprep.subr.mxu0 0.0
        %729 = vmatpush1.msra.mxu0 0.0
        %730 = vmatprep.subr.mxu0 0.0
        %731 = vmatpush1.msra.mxu0 0.0
        %732 = vmatprep.subr.mxu0 0.0
        %733 = vmatpush1.msra.mxu0 0.0
        %734 = vmatprep.subr.mxu0 0.0
        %735 = vmatpush1.msra.mxu0 0.0
        %736 = vmatprep.subr.mxu0 0.0
        %737 = vmatpush1.msra.mxu0 0.0
        %738 = vmatprep.subr.mxu0 0.0
        %739 = vmatpush1.msra.mxu0 0.0
        %740 = vmatprep.subr.mxu0 0.0
        %741 = vmatpush1.msra.mxu0 0.0
        %742 = vmatprep.subr.mxu0 0.0
        %743 = vmatpush1.msra.mxu0 0.0
        %744 = vmatprep.subr.mxu0 0.0
        %745 = vmatpush1.msra.mxu0 0.0
        %746 = vmatprep.subr.mxu0 0.0
        %747 = vmatpush1.msra.mxu0 0.0
        %748 = vmatprep.subr.mxu0 0.0
        %749 = vmatpush1.msra.mxu0 0.0
        %750 = vmatprep.subr.mxu0 0.0
        %751 = vmatpush1.msra.mxu0 0.0
        %752 = vmatprep.subr.mxu0 0.0
        %753 = vmatpush1.msra.mxu0 0.0
        %754 = vmatprep.subr.mxu0 0.0
        %755 = vmatpush1.msra.mxu0 0.0
        %756 = vmatprep.subr.mxu0 0.0
        %757 = vmatpush1.msra.mxu0 0.0
        %758 = vmatprep.subr.mxu0 0.0
        %759 = vmatpush1.msra.mxu0 0.0
        %760 = vmatprep.subr.mxu0 0.0
        %761 = vmatpush1.msra.mxu0 0.0
        %762 = vmatprep.subr.mxu0 0.0
        %763 = vmatpush1.msra.mxu0 0.0
        %764 = vmatprep.subr.mxu0 0.0
        %765 = vmatpush1.msra.mxu0 0.0
        %766 = vmatprep.subr.mxu0 0.0
        %767 = vmatpush1.msra.mxu0 0.0
        %768 = vmatprep.subr.mxu0 0.0
        %769 = vmatpush1.msra.mxu0 0.0
        %770 = vmatprep.mubr.f32.mxu0 0.0
        %771 = vmatmul.mubr.f32.gmra.mrb[0].mxu0 %v701
        %v772 = vpop.f32.mrb[0].mxu0
        %v773 = vadd.f32 0.0, %v772
        %v774 = vpop.f32.mrb[0].mxu0
        %v775 = vadd.f32 0.0, %v774
        %776 = vmatprep.mubr.f32.mxu0 0.0
        %777 = vmatmul.mubr.f32.gmra.mrb[0].mxu0 %v704
        %v778 = vpop.f32.mrb[0].mxu0
        %v779 = vadd.f32 0.0, %v778
        %v780 = vpop.f32.mrb[0].mxu0
        %v781 = vadd.f32 0.0, %v780
        %782 = vdwg.mxu0
        %v783 = vmul.f32 %v663, 1.0001
        %v784 = vmul.f32 %v665, 1.0001
        %v785 = vmul.f32 %v773, %v783
        %v786 = vmul.f32 %v775, %v784
        %v787 = vmul.f32 %v779, %v783
        %v788 = vmul.f32 %v781, %v784
        %v789 = vadd.f32 %v218, %v785
        %v790 = vadd.f32 %v219, %v786
        %v791 = vadd.f32 %v220, %v787
        %v792 = vadd.f32 %v221, %v788
        %vm793 = vcmp.gt.f32.partialorder %v592, %v599
        %vm794 = vcmp.gt.f32.partialorder %v593, %v605
        %v795 = vmul.f32 %v218, -0.0001
        %v796 = vmul.f32 %v219, -0.0001
        %v797 = vmul.f32 %v220, -0.0001
        %v798 = vmul.f32 %v221, -0.0001
        %v799 = vsel %vm793, 1, 0
        %v800 = vsel %vm794, 1, 0
        %v801 = vlaneseq
        %v802 = vshrl.u32 %v801, 7
        %v803 = vsub.s32 1, %v802
        %v804 = vrot.slane %v799, %v803
        %v805 = vlaneseq
        %v806 = vshrl.u32 %v805, 7
        %v807 = vsub.s32 1, %v806
        %v808 = vrot.slane %v800, %v807
        %vm809 = vcmp.eq.s32.totalorder %v804, 1
        %vm810 = vcmp.eq.s32.totalorder %v808, 1
        %v811 = vsel %vm809, %v795, %v789
        %v812 = vsel %vm810, %v796, %v790
        %v813 = vsel %vm809, %v797, %v791
        %v814 = vsel %vm810, %v798, %v792
        %815 = vmatprep.subr.mxu0 %v812
        %816 = vmatpush1.msra.mxu0 %v811
        %817 = vmatprep.subr.mxu0 %v814
        %818 = vmatpush1.msra.mxu0 %v813
        %819 = vmatprep.subr.mxu0 0.0
        %820 = vmatpush1.msra.mxu0 0.0
        %821 = vmatprep.subr.mxu0 0.0
        %822 = vmatpush1.msra.mxu0 0.0
        %823 = vmatprep.subr.mxu0 0.0
        %824 = vmatpush1.msra.mxu0 0.0
        %825 = vmatprep.subr.mxu0 0.0
        %826 = vmatpush1.msra.mxu0 0.0
        %827 = vmatprep.subr.mxu0 0.0
        %828 = vmatpush1.msra.mxu0 0.0
        %829 = vmatprep.subr.mxu0 0.0
        %830 = vmatpush1.msra.mxu0 0.0
        %831 = vmatprep.subr.mxu0 0.0
        %832 = vmatpush1.msra.mxu0 0.0
        %833 = vmatprep.subr.mxu0 0.0
        %834 = vmatpush1.msra.mxu0 0.0
        %835 = vmatprep.subr.mxu0 0.0
        %836 = vmatpush1.msra.mxu0 0.0
        %837 = vmatprep.subr.mxu0 0.0
        %838 = vmatpush1.msra.mxu0 0.0
        %839 = vmatprep.subr.mxu0 0.0
        %840 = vmatpush1.msra.mxu0 0.0
        %841 = vmatprep.subr.mxu0 0.0
        %842 = vmatpush1.msra.mxu0 0.0
        %843 = vmatprep.subr.mxu0 0.0
        %844 = vmatpush1.msra.mxu0 0.0
        %845 = vmatprep.subr.mxu0 0.0
        %846 = vmatpush1.msra.mxu0 0.0
        %847 = vmatprep.subr.mxu0 0.0
        %848 = vmatpush1.msra.mxu0 0.0
        %849 = vmatprep.subr.mxu0 0.0
        %850 = vmatpush1.msra.mxu0 0.0
        %851 = vmatprep.subr.mxu0 0.0
        %852 = vmatpush1.msra.mxu0 0.0
        %853 = vmatprep.subr.mxu0 0.0
        %854 = vmatpush1.msra.mxu0 0.0
        %855 = vmatprep.subr.mxu0 0.0
        %856 = vmatpush1.msra.mxu0 0.0
        %857 = vmatprep.subr.mxu0 0.0
        %858 = vmatpush1.msra.mxu0 0.0
        %859 = vmatprep.subr.mxu0 0.0
        %860 = vmatpush1.msra.mxu0 0.0
        %861 = vmatprep.subr.mxu0 0.0
        %862 = vmatpush1.msra.mxu0 0.0
        %863 = vmatprep.subr.mxu0 0.0
        %864 = vmatpush1.msra.mxu0 0.0
        %865 = vmatprep.subr.mxu0 0.0
        %866 = vmatpush1.msra.mxu0 0.0
        %867 = vmatprep.subr.mxu0 0.0
        %868 = vmatpush1.msra.mxu0 0.0
        %869 = vmatprep.subr.mxu0 0.0
        %870 = vmatpush1.msra.mxu0 0.0
        %871 = vmatprep.subr.mxu0 0.0
        %872 = vmatpush1.msra.mxu0 0.0
        %873 = vmatprep.subr.mxu0 0.0
        %874 = vmatpush1.msra.mxu0 0.0
        %875 = vmatprep.subr.mxu0 0.0
        %876 = vmatpush1.msra.mxu0 0.0
        %877 = vmatprep.subr.mxu0 0.0
        %878 = vmatpush1.msra.mxu0 0.0
        %879 = vmatprep.mubr.f32.mxu0 0.0
        %880 = vmatmul.mubr.f32.gmra.mrb[0].mxu0 %v228
        %v881 = vpop.f32.mrb[0].mxu0
        %v882 = vadd.f32 0.0, %v881
        %v883 = vpop.f32.mrb[0].mxu0
        %v884 = vadd.f32 0.0, %v883
        %885 = vdwg.mxu0
        %v886 = vxor.u32 %v882, 2147483648
        %v887 = vxor.u32 %v884, 2147483648
        %v888 = vmul.f32 %v886, 1.442695
        %v889 = vpow.pop %v888
        %v890 = vmul.f32 %v887, 1.442695
        %v891 = vpow.pop %v890
        %v892 = vadd.f32 %v889, 1.0
        %v893 = vadd.f32 %v891, 1.0
        %v894 = vrcp.pop %v892
        %v895 = vmul.f32 1.0, %v894
        %v896 = vrcp.pop %v893
        %v897 = vmul.f32 1.0, %v896
        %898 = vst [vmem:[%s215] sm:$0xff] %v895
        %899 = vst [vmem:[%s215 + $0x8] sm:$0xff] %v897
        %s900 = sand.u32 %s118, 1
        %s901 = scalar_lea.sflag [#allocation4], %s900
        %s902 = sand.u32 %s118, 1
        %s903 = smul.addr %s902, 16
        %s904 = scalar_lea.vmem [#allocation5], %s903
        // Predicated region
        $region41: #{tpu_custom_call.1} parent=35 // pred_check
          %p905 = pneg %p128
        $region42: #{tpu_custom_call.1} parent=35 // pred_check_branch
          %907 = sbr.rel (%p905) target = $region44
        $region43: #{tpu_custom_call.1} parent=35 // pred_region
          %s908 = smul.u32 2, %s21
          %s910 = ssub.s32 256, 256
          %911 = vsyncadd %s901, %s910
          %s912 = smul.addr %s908, 128
          %s913 = scalar_lea.hbm %s4, %s912
          %s915 = sshll.u32 %s904, 4
          %s916 = int_to_ptr.vmem [resolvable:$true] %s915
          %918 = dma.vmem_to_hbm [thread:$0]  %s916, 256, %s913, %s901
        $region44: #{tpu_custom_call.1} parent=35 // pred_fallthru
          _
      $region36: #{tpu_custom_call.1} parent=5 // pred_fallthru
        _
      %p919 = scmp.le.s32.totalorder 2, %s16
      // Predicated region
      $region45: #{tpu_custom_call.1} parent=5 // pred_check
        %p920 = pneg %p919
      $region46: #{tpu_custom_call.1} parent=5 // pred_check_branch
        %922 = sbr.rel (%p920) target = $region48
      $region47: #{tpu_custom_call.1} parent=5 // pred_region
        %s923 = ssub.s32 %s16, 2
        // Predicated region
        $region49: #{tpu_custom_call.1} parent=47 // pred_check
          %p924 = pneg %p134
        $region50: #{tpu_custom_call.1} parent=47 // pred_check_branch
          %926 = sbr.rel (%p924) target = $region52
        $region51: #{tpu_custom_call.1} parent=47 // pred_region
          %s927 = sand.u32 %s119, 1
          %s928 = scalar_lea.sflag [#allocation4], %s927
          %s929 = sand.u32 %s119, 1
          %s930 = smul.addr %s929, 16
          %s931 = scalar_lea.vmem [#allocation5], %s930
          %932 = dma.done %s928, 256
        $region52: #{tpu_custom_call.1} parent=47 // pred_fallthru
          _
      $region48: #{tpu_custom_call.1} parent=5 // pred_fallthru
        _
    $region6: #{tpu_custom_call.1} parent=1 // loop_footer
      %s20 = sadd.s32 1, %s16
    $region7: #{tpu_custom_call.1} parent=1 // loop_footer_branch
      %15 = sbr.rel target = $region3
    $region8: #{tpu_custom_call.1} parent=1 // loop_exit
      _
    %933 = vsyncpa [#allocation3], 1
    %s934 = scalar_lea.sflag [#allocation3], 1
    %935 = vsyncpa %s934, 1
    %936 = vsyncpa [#allocation4], 1
    %s937 = scalar_lea.sflag [#allocation4], 1
    %938 = vsyncpa %s937, 1

</llo_original>
